<compile_context>
chip_gen: v7x
topology: tpu7x:2x2x1
jax: 0.10.0
libtpu: 0.0.40
codegen_flags: <defaults>
</compile_context>

<pallas_src>
import functools

import jax
import jax.numpy as jnp
from jax.experimental import pallas as pl
from jax.experimental.pallas import tpu as pltpu


def _round_up(x, m):
    return ((x + m - 1) // m) * m


def _spectral_mul_kernel(x_ref, w_ref, o_ref):
    """Complex per-mode channel contraction on the VPU.

    Block shapes:
      x_ref: (1, 2, B,  Ci, TM)   [corner, re/im, batch, in-ch,  modes]
      w_ref: (1, 2, Ci, Co, TM)   [corner, re/im, in-ch, out-ch, modes]
      o_ref: (1, 2, B,  Co, TM)   [corner, re/im, batch, out-ch, modes]

    TM (mode tile) is a multiple of 128 -> lane-dense loads/stores.
    """
    xr = x_ref[0, 0][:, :, None, :]          # (B, Ci, 1, TM)
    xi = x_ref[0, 1][:, :, None, :]
    wr = w_ref[0, 0][None, :, :, :]          # (1, Ci, Co, TM)
    wi = w_ref[0, 1][None, :, :, :]
    # (a + ib)(c + id) = (ac - bd) + i(ad + bc), contracted over Ci (axis=1).
    o_ref[0, 0] = jnp.sum(xr * wr - xi * wi, axis=1)   # (B, Co, TM)
    o_ref[0, 1] = jnp.sum(xr * wi + xi * wr, axis=1)


def spectral_conv2d_fast(x, weights1, weights2, modes1, modes2):
    """Forward pass of SpectralConv2d_fast.

    x:        (B, C_in, H, W) float32   (NCHW, same as PyTorch)
    weights1: (C_in, C_out, modes1, modes2) complex64
    weights2: (C_in, C_out, modes1, modes2) complex64
    returns:  (B, C_out, H, W) float32
    """
    B, Ci, H, W = x.shape
    Co = weights1.shape[1]
    Wh = W // 2 + 1
    M = modes1 * modes2

    # TODO(synk): FFT / inverse FFT have no Pallas TPU primitive; done in JAX.
    x_ft = jnp.fft.rfft2(x, norm="forward")            # (B, Ci, H, Wh) c64

    # Both spectral corners in one slab: (corner, re/im, B, Ci, M).
    lo = x_ft[:, :, :modes1, :modes2]
    hi = x_ft[:, :, H - modes1:, :modes2]
    xc = jnp.stack([lo, hi], axis=0).reshape(2, B, Ci, M)
    x_slab = jnp.stack([jnp.real(xc), jnp.imag(xc)], axis=1).astype(jnp.float32)

    wc = jnp.stack([weights1, weights2], axis=0).reshape(2, Ci, Co, M)
    w_slab = jnp.stack([jnp.real(wc), jnp.imag(wc)], axis=1).astype(jnp.float32)

    # Pad the mode (lane) axis to a multiple of 128 -> unmasked vector stores.
    mp_base = _round_up(M, 128)
    tile_m = min(512, mp_base)          # largest tile; still tiny in VMEM
    Mp = _round_up(mp_base, tile_m)
    if Mp != M:
        pad = ((0, 0),) * 4 + ((0, Mp - M),)
        x_slab = jnp.pad(x_slab, pad)
        w_slab = jnp.pad(w_slab, pad)
    n_mt = Mp // tile_m

    x_spec = pl.BlockSpec((1, 2, B, Ci, tile_m), lambda c, t: (c, 0, 0, 0, t))
    w_spec = pl.BlockSpec((1, 2, Ci, Co, tile_m), lambda c, t: (c, 0, 0, 0, t))
    o_spec = pl.BlockSpec((1, 2, B, Co, tile_m), lambda c, t: (c, 0, 0, 0, t))

    out_slab = pl.pallas_call(
        _spectral_mul_kernel,
        out_shape=jax.ShapeDtypeStruct((2, 2, B, Co, Mp), jnp.float32),
        grid=(2, n_mt),
        in_specs=[x_spec, w_spec],
        out_specs=o_spec,
        compiler_params=pltpu.CompilerParams(
            dimension_semantics=("parallel", "parallel")),
    )(x_slab, w_slab)

    out_c = (out_slab[:, 0, :, :, :M]
             + 1j * out_slab[:, 1, :, :, :M]).astype(jnp.complex64)
    out_c = out_c.reshape(2, B, Co, modes1, modes2)

    out_ft = jnp.zeros((B, Co, H, Wh), dtype=jnp.complex64)
    out_ft = out_ft.at[:, :, :modes1, :modes2].set(out_c[0])
    out_ft = out_ft.at[:, :, H - modes1:, :modes2].set(out_c[1])

    return jnp.fft.irfft2(out_ft, s=(H, W), norm="forward")


def _reference(x, weights1, weights2, modes1, modes2):
    """Pure-JAX reference mirroring the PyTorch module exactly."""
    B, Ci, H, W = x.shape
    Co = weights1.shape[1]
    x_ft = jnp.fft.rfft2(x, norm="forward")
    out_ft = jnp.zeros((B, Co, H, W // 2 + 1), dtype=jnp.complex64)
    out_ft = out_ft.at[:, :, :modes1, :modes2].set(
        jnp.einsum("bixy,ioxy->boxy", x_ft[:, :, :modes1, :modes2], weights1))
    out_ft = out_ft.at[:, :, H - modes1:, :modes2].set(
        jnp.einsum("bixy,ioxy->boxy", x_ft[:, :, H - modes1:, :modes2], weights2))
    return jnp.fft.irfft2(out_ft, s=(H, W), norm="forward")


if __name__ == "__main__":
    B, C_in, C_out, H, W = 2, 4, 4, 16, 16
    modes1, modes2 = 4, 4

    key = jax.random.PRNGKey(0)
    kx, kw1r, kw1i, kw2r, kw2i = jax.random.split(key, 5)

    x = jax.random.normal(kx, (B, C_in, H, W), dtype=jnp.float32)

    # Deterministic init matching nn.Parameter(scale * torch.rand(..., cfloat)).
    scale = 1.0 / (C_in * C_out)
    w_shape = (C_in, C_out, modes1, modes2)
    weights1 = (scale * (jax.random.uniform(kw1r, w_shape, dtype=jnp.float32)
                         + 1j * jax.random.uniform(kw1i, w_shape, dtype=jnp.float32))
                ).astype(jnp.complex64)
    weights2 = (scale * (jax.random.uniform(kw2r, w_shape, dtype=jnp.float32)
                         + 1j * jax.random.uniform(kw2i, w_shape, dtype=jnp.float32))
                ).astype(jnp.complex64)

    fwd = jax.jit(functools.partial(spectral_conv2d_fast,
                                    modes1=modes1, modes2=modes2))
    out = jax.block_until_ready(fwd(x, weights1, weights2))

    ref = jax.block_until_ready(_reference(x, weights1, weights2, modes1, modes2))
    assert out.shape == (B, C_out, H, W)
    assert out.dtype == jnp.float32
    assert jnp.allclose(out, ref, atol=1e-5, rtol=1e-5)

    print("KERNEL_OK")
</pallas_src>

<mosaic_0001>
module attributes {stable_mosaic.version = 11 : i64} {
  func.func @_spectral_mul_kernel(%arg0: i32, %arg1: i32, %arg2: memref<1x2x2x4x128xf32, #tpu.memory_space<vmem>>, %arg3: memref<1x2x4x4x128xf32, #tpu.memory_space<vmem>>, %arg4: memref<1x2x2x4x128xf32, #tpu.memory_space<vmem>>) attributes {dimension_semantics = [#tpu.dimension_semantics<parallel>, #tpu.dimension_semantics<parallel>], iteration_bounds = array<i64: 2, 1>, scalar_prefetch = 0 : i64, scratch_operands = 0 : i64, tpu.core_type = #tpu.core_type<tc>, window_params = [{transform_indices = @transform_0, window_bounds = array<i64: 1, 2, 2, 4, 128>}, {transform_indices = @transform_1, window_bounds = array<i64: 1, 2, 4, 4, 128>}, {transform_indices = @transform_2, window_bounds = array<i64: 1, 2, 2, 4, 128>}]} {
    %c0 = arith.constant 0 : index
    %c0_0 = arith.constant 0 : index
    %c0_1 = arith.constant 0 : index
    %c0_2 = arith.constant 0 : index
    %c0_3 = arith.constant 0 : index
    %0 = vector.load %arg2[%c0, %c0_0, %c0_1, %c0_2, %c0_3] : memref<1x2x2x4x128xf32, #tpu.memory_space<vmem>>, vector<1x1x2x4x128xf32>
    %1 = vector.shape_cast %0 : vector<1x1x2x4x128xf32> to vector<2x4x128xf32>
    %2 = vector.shape_cast %1 : vector<2x4x128xf32> to vector<2x4x1x128xf32>
    %c0_4 = arith.constant 0 : index
    %c1 = arith.constant 1 : index
    %c0_5 = arith.constant 0 : index
    %c0_6 = arith.constant 0 : index
    %c0_7 = arith.constant 0 : index
    %3 = vector.load %arg2[%c0_4, %c1, %c0_5, %c0_6, %c0_7] : memref<1x2x2x4x128xf32, #tpu.memory_space<vmem>>, vector<1x1x2x4x128xf32>
    %4 = vector.shape_cast %3 : vector<1x1x2x4x128xf32> to vector<2x4x128xf32>
    %5 = vector.shape_cast %4 : vector<2x4x128xf32> to vector<2x4x1x128xf32>
    %c0_8 = arith.constant 0 : index
    %c0_9 = arith.constant 0 : index
    %c0_10 = arith.constant 0 : index
    %c0_11 = arith.constant 0 : index
    %c0_12 = arith.constant 0 : index
    %6 = vector.load %arg3[%c0_8, %c0_9, %c0_10, %c0_11, %c0_12] : memref<1x2x4x4x128xf32, #tpu.memory_space<vmem>>, vector<1x1x4x4x128xf32>
    %7 = vector.shape_cast %6 : vector<1x1x4x4x128xf32> to vector<4x4x128xf32>
    %8 = vector.shape_cast %7 : vector<4x4x128xf32> to vector<1x4x4x128xf32>
    %c0_13 = arith.constant 0 : index
    %c1_14 = arith.constant 1 : index
    %c0_15 = arith.constant 0 : index
    %c0_16 = arith.constant 0 : index
    %c0_17 = arith.constant 0 : index
    %9 = vector.load %arg3[%c0_13, %c1_14, %c0_15, %c0_16, %c0_17] : memref<1x2x4x4x128xf32, #tpu.memory_space<vmem>>, vector<1x1x4x4x128xf32>
    %10 = vector.shape_cast %9 : vector<1x1x4x4x128xf32> to vector<4x4x128xf32>
    %11 = vector.shape_cast %10 : vector<4x4x128xf32> to vector<1x4x4x128xf32>
    %12 = vector.broadcast %2 : vector<2x4x1x128xf32> to vector<2x4x4x128xf32>
    %13 = vector.broadcast %8 : vector<1x4x4x128xf32> to vector<2x4x4x128xf32>
    %14 = arith.mulf %12, %13 : vector<2x4x4x128xf32>
    %15 = vector.broadcast %5 : vector<2x4x1x128xf32> to vector<2x4x4x128xf32>
    %16 = vector.broadcast %11 : vector<1x4x4x128xf32> to vector<2x4x4x128xf32>
    %17 = arith.mulf %15, %16 : vector<2x4x4x128xf32>
    %18 = arith.subf %14, %17 : vector<2x4x4x128xf32>
    %cst = arith.constant dense<0.000000e+00> : vector<2x4x128xf32>
    %19 = vector.multi_reduction <add>, %18, %cst [1] : vector<2x4x4x128xf32> to vector<2x4x128xf32>
    %c0_18 = arith.constant 0 : index
    %c0_19 = arith.constant 0 : index
    %c0_20 = arith.constant 0 : index
    %c0_21 = arith.constant 0 : index
    %c0_22 = arith.constant 0 : index
    %20 = vector.load %arg4[%c0_18, %c0_19, %c0_20, %c0_21, %c0_22] : memref<1x2x2x4x128xf32, #tpu.memory_space<vmem>>, vector<1x1x2x4x128xf32>
    %21 = vector.shape_cast %20 : vector<1x1x2x4x128xf32> to vector<2x4x128xf32>
    %22 = vector.shape_cast %19 : vector<2x4x128xf32> to vector<1x1x2x4x128xf32>
    tpu.vector_store %arg4[%c0_18, %c0_19, %c0_20, %c0_21, %c0_22], %22 {strides = array<i32>} : memref<1x2x2x4x128xf32, #tpu.memory_space<vmem>>, vector<1x1x2x4x128xf32>,
    %23 = vector.broadcast %2 : vector<2x4x1x128xf32> to vector<2x4x4x128xf32>
    %24 = vector.broadcast %11 : vector<1x4x4x128xf32> to vector<2x4x4x128xf32>
    %25 = arith.mulf %23, %24 : vector<2x4x4x128xf32>
    %26 = vector.broadcast %5 : vector<2x4x1x128xf32> to vector<2x4x4x128xf32>
    %27 = vector.broadcast %8 : vector<1x4x4x128xf32> to vector<2x4x4x128xf32>
    %28 = arith.mulf %26, %27 : vector<2x4x4x128xf32>
    %29 = arith.addf %25, %28 : vector<2x4x4x128xf32>
    %cst_23 = arith.constant dense<0.000000e+00> : vector<2x4x128xf32>
    %30 = vector.multi_reduction <add>, %29, %cst_23 [1] : vector<2x4x4x128xf32> to vector<2x4x128xf32>
    %c0_24 = arith.constant 0 : index
    %c1_25 = arith.constant 1 : index
    %c0_26 = arith.constant 0 : index
    %c0_27 = arith.constant 0 : index
    %c0_28 = arith.constant 0 : index
    %31 = vector.load %arg4[%c0_24, %c1_25, %c0_26, %c0_27, %c0_28] : memref<1x2x2x4x128xf32, #tpu.memory_space<vmem>>, vector<1x1x2x4x128xf32>
    %32 = vector.shape_cast %31 : vector<1x1x2x4x128xf32> to vector<2x4x128xf32>
    %33 = vector.shape_cast %30 : vector<2x4x128xf32> to vector<1x1x2x4x128xf32>
    tpu.vector_store %arg4[%c0_24, %c1_25, %c0_26, %c0_27, %c0_28], %33 {strides = array<i32>} : memref<1x2x2x4x128xf32, #tpu.memory_space<vmem>>, vector<1x1x2x4x128xf32>,
    return
  }
  func.func @transform_0(%arg0: i32, %arg1: i32) -> (i32, i32, i32, i32, i32) {
    %c0_i32 = arith.constant 0 : i32
    %c0_i32_0 = arith.constant 0 : i32
    %c0_i32_1 = arith.constant 0 : i32
    %c0_i32_2 = arith.constant 0 : i32
    return %arg0, %c0_i32, %c0_i32_0, %c0_i32_1, %arg1 : i32, i32, i32, i32, i32
  }
  func.func @transform_1(%arg0: i32, %arg1: i32) -> (i32, i32, i32, i32, i32) {
    %c0_i32 = arith.constant 0 : i32
    %c0_i32_0 = arith.constant 0 : i32
    %c0_i32_1 = arith.constant 0 : i32
    %c0_i32_2 = arith.constant 0 : i32
    return %arg0, %c0_i32, %c0_i32_0, %c0_i32_1, %arg1 : i32, i32, i32, i32, i32
  }
  func.func @transform_2(%arg0: i32, %arg1: i32) -> (i32, i32, i32, i32, i32) {
    %c0_i32 = arith.constant 0 : i32
    %c0_i32_0 = arith.constant 0 : i32
    %c0_i32_1 = arith.constant 0 : i32
    %c0_i32_2 = arith.constant 0 : i32
    return %arg0, %c0_i32, %c0_i32_0, %c0_i32_1, %arg1 : i32, i32, i32, i32, i32
  }
}

</mosaic_0001>

<llo_original>
// kernel: custom-call
$region0: #{custom-call}
  %s0 = inlined_call_operand.hbm [shape: c64[4,4,4,4], index: 0, kind: input, shape index: {}]
  %s1 = inlined_call_operand.vmem [shape: f32[4,4,4,4], index: 1, kind: output, shape index: {}]
  $region1: #{custom-call} parent=0
    #allocation0 [shape = 's32[1]{0}', space=sflag, size = 0x4, scoped, tag = 'scoped memory for custom-call']
    %2 = vsyncpa [#allocation0], 0
    %s3 = sshll.u32 %s1, 4
    %s4 = int_to_ptr.vmem [resolvable:$true] %s3
    %6 = dma.hbm_to_vmem [thread:$0]  %s0, 1024, %s4, [#allocation0]
    %7 = dma.done [#allocation0], 1024
    %8 = vsyncpa [#allocation0], 1

// kernel: custom-call.1
$region0: #{custom-call.1}
  %s0 = inlined_call_operand.hbm [shape: c64[4,4,4,4], index: 0, kind: input, shape index: {}]
  %s1 = inlined_call_operand.vmem [shape: f32[4,4,4,4], index: 1, kind: output, shape index: {}]
  %s2 = scalar_lea.hbm %s0, 1024
  $region1: #{custom-call.1} parent=0
    #allocation0 [shape = 's32[1]{0}', space=sflag, size = 0x4, scoped, tag = 'scoped memory for custom-call.1']
    %3 = vsyncpa [#allocation0], 0
    %s4 = sshll.u32 %s1, 4
    %s5 = int_to_ptr.vmem [resolvable:$true] %s4
    %7 = dma.hbm_to_vmem [thread:$0]  %s2, 1024, %s5, [#allocation0]
    %8 = dma.done [#allocation0], 1024
    %9 = vsyncpa [#allocation0], 1

// kernel: spectral_conv2d_fast.1
$region0: #{spectral_conv2d_fast.1}
  #allocation0 [shape = 'u32[]', space=smem, size = 0x4, offset = 0x4, fixed_abs, tag = 'smem constant byte address 0x4 - core index']
  #allocation1 [shape = 'u32[144,128]{1,0:T(1,128)}', space=vmem, size = 0x12000, scoped, tag = 'internal scratch']
  %s0 = inlined_call_operand.vmem [shape: f32[2,2,2,4,128], index: 0, kind: input, shape index: {}]
  %s1 = inlined_call_operand.vmem [shape: f32[2,2,4,4,128], index: 1, kind: input, shape index: {}]
  %s2 = inlined_call_operand.vmem [shape: f32[2,2,2,4,128], index: 2, kind: output, shape index: {}]
  %s3 = sld [smem:[#allocation0]]
  $region41: #{spectral_conv2d_fast.1} parent=0
    _
  %s5 = ssub.s32 1, %s3
  %s6 = scalar_select 0, %s5, %s3
  loop: start=0, step=1, limit=4
  $region2: #{spectral_conv2d_fast.1} parent=0 // loop_pre_header
    _
  $region3: #{spectral_conv2d_fast.1} parent=0 // loop_header
    %s8 = sphi 0, %s12
    %p9 = scmp.ge.s32.totalorder %s8, 4
    %s15 = sphi 0, %s27
    %s16 = sphi 0, %s23
    %s17 = sphi 0, %s15
    %s18 = sphi 0, %s16
    %s19 = sphi 0, %s17
    %s20 = sphi 0, %s18
    %s32 = sphi 0, %s34
    %s35 = sphi 0, %s32
    %s36 = sphi 0, %s35
    %s52 = sphi 0, %s36
    %s60 = sphi 0, %s62
    %s63 = sphi 0, %s60
    %s64 = sphi 0, %s63
    %s80 = sphi 0, %s64
    %s88 = sphi 0, %s90
    %s91 = sphi 0, %s88
    %s92 = sphi 0, %s91
    %s108 = sphi 0, %s92
  $region4: #{spectral_conv2d_fast.1} parent=0 // loop_header_branch
    %11 = sbr.rel (%p9) target = $region8
  $region5: #{spectral_conv2d_fast.1} parent=0 // loop_body
    %s13 = ssub.s32 %s8, 1
    %s14 = ssub.s32 %s8, 2
    %s21 = sadd.s32 1, %s16
    %p22 = scmp.ge.s32.totalorder %s21, 1
    %s23 = scalar_select %p22, 0, %s21
    %s24 = sadd.s32 1, %s15
    %s25 = scalar_select %p22, %s24, %s15
    %p26 = scmp.ge.s32.totalorder %s25, 2
    %s27 = scalar_select %p26, 0, %s25
    %s28 = ssub.s32 %s15, %s27
    %s29 = ssub.s32 %s16, %s23
    %s30 = sor.u32 %s28, %s29
    %p31 = scmp.eq.s32.totalorder %s30, 0
    %s33 = sadd.s32 %s32, 1
    %s34 = scalar_select %p31, %s32, %s33
    %p37 = pneg %p31
    %p38 = scmp.eq.s32.totalorder %s8, 1
    %p39 = por %p37, %p38
    %p40 = scmp.ne.s32.totalorder %s32, %s35
    %p41 = scmp.eq.s32.totalorder %s8, 0
    %p42 = por %p40, %p41
    %p43 = scmp.ne.s32.totalorder %s32, %s35
    %p44 = scmp.eq.s32.totalorder %s13, 1
    %p45 = por %p43, %p44
    %p46 = scmp.ne.s32.totalorder %s35, %s36
    %p47 = scmp.eq.s32.totalorder %s13, 0
    %p48 = por %p46, %p47
    %p49 = scmp.ne.s32.totalorder %s35, %s36
    %p50 = scmp.eq.s32.totalorder %s14, 1
    %p51 = por %p49, %p50
    %p53 = scmp.ne.s32.totalorder %s36, %s52
    %p54 = scmp.eq.s32.totalorder %s14, 0
    %p55 = por %p53, %p54
    %s56 = ssub.s32 %s15, %s27
    %s57 = ssub.s32 %s16, %s23
    %s58 = sor.u32 %s56, %s57
    %p59 = scmp.eq.s32.totalorder %s58, 0
    %s61 = sadd.s32 %s60, 1
    %s62 = scalar_select %p59, %s60, %s61
    %p65 = pneg %p59
    %p66 = scmp.eq.s32.totalorder %s8, 1
    %p67 = por %p65, %p66
    %p68 = scmp.ne.s32.totalorder %s60, %s63
    %p69 = scmp.eq.s32.totalorder %s8, 0
    %p70 = por %p68, %p69
    %p71 = scmp.ne.s32.totalorder %s60, %s63
    %p72 = scmp.eq.s32.totalorder %s13, 1
    %p73 = por %p71, %p72
    %p74 = scmp.ne.s32.totalorder %s63, %s64
    %p75 = scmp.eq.s32.totalorder %s13, 0
    %p76 = por %p74, %p75
    %p77 = scmp.ne.s32.totalorder %s63, %s64
    %p78 = scmp.eq.s32.totalorder %s14, 1
    %p79 = por %p77, %p78
    %p81 = scmp.ne.s32.totalorder %s64, %s80
    %p82 = scmp.eq.s32.totalorder %s14, 0
    %p83 = por %p81, %p82
    %s84 = ssub.s32 %s15, %s27
    %s85 = ssub.s32 %s16, %s23
    %s86 = sor.u32 %s84, %s85
    %p87 = scmp.eq.s32.totalorder %s86, 0
    %s89 = sadd.s32 %s88, 1
    %s90 = scalar_select %p87, %s88, %s89
    %p93 = pneg %p87
    %p94 = scmp.eq.s32.totalorder %s8, 1
    %p95 = por %p93, %p94
    %p96 = scmp.ne.s32.totalorder %s88, %s91
    %p97 = scmp.eq.s32.totalorder %s8, 0
    %p98 = por %p96, %p97
    %p99 = scmp.ne.s32.totalorder %s88, %s91
    %p100 = scmp.eq.s32.totalorder %s13, 1
    %p101 = por %p99, %p100
    %p102 = scmp.ne.s32.totalorder %s91, %s92
    %p103 = scmp.eq.s32.totalorder %s13, 0
    %p104 = por %p102, %p103
    %p105 = scmp.ne.s32.totalorder %s91, %s92
    %p106 = scmp.eq.s32.totalorder %s14, 1
    %p107 = por %p105, %p106
    %p109 = scmp.ne.s32.totalorder %s92, %s108
    %p110 = scmp.eq.s32.totalorder %s14, 0
    %p111 = por %p109, %p110
    %p112 = scmp.le.s32.totalorder 1, %s8
    %p113 = scmp.lt.s32.totalorder %s8, 3
    %p114 = pnand %p112, %p113
    %p115 = pneg %p114
    // Predicated region
    $region9: #{spectral_conv2d_fast.1} parent=5 // pred_check
      _
    $region10: #{spectral_conv2d_fast.1} parent=5 // pred_check_branch
      %117 = sbr.rel (%p114) target = $region12
    $region11: #{spectral_conv2d_fast.1} parent=5 // pred_region
      %s118 = ssub.s32 %s8, 1
    $region12: #{spectral_conv2d_fast.1} parent=5 // pred_fallthru
      _
    %p119 = scmp.lt.s32.totalorder %s8, 2
    // Predicated region
    $region13: #{spectral_conv2d_fast.1} parent=5 // pred_check
      %p120 = pneg %p119
    $region14: #{spectral_conv2d_fast.1} parent=5 // pred_check_branch
      %122 = sbr.rel (%p120) target = $region16
    $region15: #{spectral_conv2d_fast.1} parent=5 // pred_region
      // Predicated region
      $region17: #{spectral_conv2d_fast.1} parent=15 // pred_check
        %p123 = pneg %p42
      $region18: #{spectral_conv2d_fast.1} parent=15 // pred_check_branch
        %125 = sbr.rel (%p123) target = $region20
      $region19: #{spectral_conv2d_fast.1} parent=15 // pred_region
        %p126 = scmp.lt.s32.totalorder %s15, 1
        %s127 = scalar_select %p126, %s15, 1
        %p128 = scmp.lt.s32.totalorder %s16, 0
        %s129 = scalar_select %p128, %s16, 0
        %s130 = smul.addr %s127, 4
        %s131 = sadd.s32 %s129, %s130
        %s132 = smul.addr %s131, 4
        %s133 = scalar_lea.vmem %s0, %s132
      $region20: #{spectral_conv2d_fast.1} parent=15 // pred_fallthru
        _
      // Predicated region
      $region21: #{spectral_conv2d_fast.1} parent=15 // pred_check
        %p134 = pneg %p70
      $region22: #{spectral_conv2d_fast.1} parent=15 // pred_check_branch
        %136 = sbr.rel (%p134) target = $region24
      $region23: #{spectral_conv2d_fast.1} parent=15 // pred_region
        %p137 = scmp.lt.s32.totalorder %s15, 1
        %s138 = scalar_select %p137, %s15, 1
        %p139 = scmp.lt.s32.totalorder %s16, 0
        %s140 = scalar_select %p139, %s16, 0
        %s141 = smul.addr %s138, 8
        %s142 = sadd.s32 %s140, %s141
        %s143 = smul.addr %s142, 4
        %s144 = scalar_lea.vmem %s1, %s143
      $region24: #{spectral_conv2d_fast.1} parent=15 // pred_fallthru
        _
    $region16: #{spectral_conv2d_fast.1} parent=5 // pred_fallthru
      _
    %p145 = scmp.le.s32.totalorder 1, %s8
    %p146 = scmp.lt.s32.totalorder %s8, 3
    %p147 = pnand %p145, %p146
    %p148 = pneg %p147
    // Predicated region
    $region25: #{spectral_conv2d_fast.1} parent=5 // pred_check
      _
    $region26: #{spectral_conv2d_fast.1} parent=5 // pred_check_branch
      %150 = sbr.rel (%p147) target = $region28
    $region27: #{spectral_conv2d_fast.1} parent=5 // pred_region
      %s151 = ssub.s32 %s8, 1
      %p152 = scmp.lt.s32.totalorder %s17, 1
      %s153 = scalar_select %p152, %s17, 1
      %p154 = scmp.lt.s32.totalorder %s18, 0
      %s155 = scalar_select %p154, %s18, 0
      %s156 = smul.addr %s153, 4
      %s157 = sadd.s32 %s155, %s156
      %s158 = smul.addr %s157, 4
      %s159 = scalar_lea.vmem %s0, %s158
      %p160 = pneg %p48
      %p161 = pneg %p45
      %p162 = scmp.lt.s32.totalorder %s17, 1
      %s163 = scalar_select %p162, %s17, 1
      %p164 = scmp.lt.s32.totalorder %s18, 0
      %s165 = scalar_select %p164, %s18, 0
      %s166 = smul.addr %s163, 8
      %s167 = sadd.s32 %s165, %s166
      %s168 = smul.addr %s167, 4
      %s169 = scalar_lea.vmem %s1, %s168
      %p170 = pneg %p76
      %p171 = pneg %p73
      %p172 = pneg %p104
      %p173 = pneg %p101
      %p174 = scmp.lt.s32.totalorder %s17, 1
      %s175 = scalar_select %p174, %s17, 1
      %p176 = scmp.lt.s32.totalorder %s18, 0
      %s177 = scalar_select %p176, %s18, 0
      %s178 = smul.addr %s175, 4
      %s179 = sadd.s32 %s177, %s178
      %s180 = smul.addr %s179, 4
      %s181 = scalar_lea.vmem %s2, %s180
      %p182 = scmp.lt.s32.totalorder %s17, 1
      %s183 = scalar_select %p182, %s17, 1
      %p184 = scmp.lt.s32.totalorder %s18, 0
      %s185 = scalar_select %p184, %s18, 0
      %s186 = smul.addr %s183, 4
      %s187 = sadd.s32 %s185, %s186
      %s188 = smul.addr %s187, 4
      %s189 = scalar_lea.vmem %s0, %s188
      %p190 = scmp.lt.s32.totalorder %s17, 1
      %s191 = scalar_select %p190, %s17, 1
      %p192 = scmp.lt.s32.totalorder %s18, 0
      %s193 = scalar_select %p192, %s18, 0
      %s194 = smul.addr %s191, 8
      %s195 = sadd.s32 %s193, %s194
      %s196 = smul.addr %s195, 4
      %s197 = scalar_lea.vmem %s1, %s196
      %p198 = scmp.lt.s32.totalorder %s17, 1
      %s199 = scalar_select %p198, %s17, 1
      %p200 = scmp.lt.s32.totalorder %s18, 0
      %s201 = scalar_select %p200, %s18, 0
      %s202 = smul.addr %s199, 4
      %s203 = sadd.s32 %s201, %s202
      %s204 = smul.addr %s203, 4
      %s205 = scalar_lea.vmem %s2, %s204
      %v206 = vld [vmem:[%s189] sm:$0xf]
      %v207 = vld [vmem:[%s189 + $0x4] sm:$0xf]
      %v211 = vunpack.c.l.s4 1966171168
      %v212 = vunpack.c.0.s8 %v211
      %v213 = vlaneseq
      %v214 = vshrl.u32 %v213, 7
      %v215 = vsub.s32 %v212, %v214
      %v216 = vrot.slane %v206, %v215
      %v217 = vcombine.high %v216, %v216
      %v219 = vunpack.c.l.s4 1966171168
      %v220 = vunpack.c.0.s8 %v219
      %v221 = vlaneseq
      %v222 = vshrl.u32 %v221, 7
      %v223 = vsub.s32 %v220, %v222
      %v224 = vrot.slane %v216, %v223
      %v226 = vunpack.c.l.s4 1966171168
      %v227 = vunpack.c.0.s8 %v226
      %v228 = vlaneseq
      %v229 = vshrl.u32 %v228, 7
      %v230 = vsub.s32 %v227, %v229
      %v231 = vrot.slane %v217, %v230
      %v232 = vcombine.high %v224, %v224
      %v233 = vcombine.high %v231, %v231
      %v235 = vunpack.c.l.s4 1966171168
      %v236 = vunpack.c.0.s8 %v235
      %v237 = vlaneseq
      %v238 = vshrl.u32 %v237, 7
      %v239 = vsub.s32 %v236, %v238
      %v240 = vrot.slane %v207, %v239
      %v241 = vcombine.high %v240, %v240
      %v243 = vunpack.c.l.s4 1966171168
      %v244 = vunpack.c.0.s8 %v243
      %v245 = vlaneseq
      %v246 = vshrl.u32 %v245, 7
      %v247 = vsub.s32 %v244, %v246
      %v248 = vrot.slane %v240, %v247
      %v250 = vunpack.c.l.s4 1966171168
      %v251 = vunpack.c.0.s8 %v250
      %v252 = vlaneseq
      %v253 = vshrl.u32 %v252, 7
      %v254 = vsub.s32 %v251, %v253
      %v255 = vrot.slane %v241, %v254
      %v256 = vcombine.high %v248, %v248
      %v257 = vcombine.high %v255, %v255
      %s258 = scalar_lea.vmem %s189, 8
      %v259 = vld [vmem:[%s258] sm:$0xf]
      %v260 = vld [vmem:[%s258 + $0x4] sm:$0xf]
      %v264 = vunpack.c.l.s4 1966171168
      %v265 = vunpack.c.0.s8 %v264
      %v266 = vlaneseq
      %v267 = vshrl.u32 %v266, 7
      %v268 = vsub.s32 %v265, %v267
      %v269 = vrot.slane %v259, %v268
      %v270 = vcombine.high %v269, %v269
      %v272 = vunpack.c.l.s4 1966171168
      %v273 = vunpack.c.0.s8 %v272
      %v274 = vlaneseq
      %v275 = vshrl.u32 %v274, 7
      %v276 = vsub.s32 %v273, %v275
      %v277 = vrot.slane %v269, %v276
      %v279 = vunpack.c.l.s4 1966171168
      %v280 = vunpack.c.0.s8 %v279
      %v281 = vlaneseq
      %v282 = vshrl.u32 %v281, 7
      %v283 = vsub.s32 %v280, %v282
      %v284 = vrot.slane %v270, %v283
      %v285 = vcombine.high %v277, %v277
      %v286 = vcombine.high %v284, %v284
      %v288 = vunpack.c.l.s4 1966171168
      %v289 = vunpack.c.0.s8 %v288
      %v290 = vlaneseq
      %v291 = vshrl.u32 %v290, 7
      %v292 = vsub.s32 %v289, %v291
      %v293 = vrot.slane %v260, %v292
      %v294 = vcombine.high %v293, %v293
      %v296 = vunpack.c.l.s4 1966171168
      %v297 = vunpack.c.0.s8 %v296
      %v298 = vlaneseq
      %v299 = vshrl.u32 %v298, 7
      %v300 = vsub.s32 %v297, %v299
      %v301 = vrot.slane %v293, %v300
      %v303 = vunpack.c.l.s4 1966171168
      %v304 = vunpack.c.0.s8 %v303
      %v305 = vlaneseq
      %v306 = vshrl.u32 %v305, 7
      %v307 = vsub.s32 %v304, %v306
      %v308 = vrot.slane %v294, %v307
      %v309 = vcombine.high %v301, %v301
      %v310 = vcombine.high %v308, %v308
      %v311 = vld [vmem:[%s197] sm:$0xf]
      %v312 = vld [vmem:[%s197 + $0x4] sm:$0xf]
      %v313 = vld [vmem:[%s197 + $0x8] sm:$0xf]
      %v314 = vld [vmem:[%s197 + $0xc] sm:$0xf]
      %s315 = scalar_lea.vmem %s197, 16
      %v316 = vld [vmem:[%s315] sm:$0xf]
      %v317 = vld [vmem:[%s315 + $0x4] sm:$0xf]
      %v318 = vld [vmem:[%s315 + $0x8] sm:$0xf]
      %v319 = vld [vmem:[%s315 + $0xc] sm:$0xf]
      %v320 = vlaneseq
      %v321 = vshrl.u32 %v320, 7
      %v322 = vsub.s32 0, %v321
      %v323 = vrot.slane %v224, %v322
      %v324 = vlaneseq
      %v325 = vshrl.u32 %v324, 7
      %v326 = vsub.s32 0, %v325
      %v327 = vrot.slane %v231, %v326
      %v328 = vlaneseq
      %v329 = vshrl.u32 %v328, 7
      %v330 = vsub.s32 0, %v329
      %v331 = vrot.slane %v232, %v330
      %v332 = vlaneseq
      %v333 = vshrl.u32 %v332, 7
      %v334 = vsub.s32 0, %v333
      %v335 = vrot.slane %v233, %v334
      %v336 = vlaneseq
      %v337 = vshrl.u32 %v336, 7
      %v338 = vsub.s32 0, %v337
      %v339 = vrot.slane %v248, %v338
      %v340 = vlaneseq
      %v341 = vshrl.u32 %v340, 7
      %v342 = vsub.s32 0, %v341
      %v343 = vrot.slane %v255, %v342
      %v344 = vlaneseq
      %v345 = vshrl.u32 %v344, 7
      %v346 = vsub.s32 0, %v345
      %v347 = vrot.slane %v256, %v346
      %v348 = vlaneseq
      %v349 = vshrl.u32 %v348, 7
      %v350 = vsub.s32 0, %v349
      %v351 = vrot.slane %v257, %v350
      %v360 = vmul.f32 %v323, %v311
      %v361 = vmul.f32 %v327, %v312
      %v362 = vmul.f32 %v331, %v313
      %v363 = vmul.f32 %v335, %v314
      %v364 = vmul.f32 %v339, %v311
      %v365 = vmul.f32 %v343, %v312
      %v366 = vmul.f32 %v347, %v313
      %v367 = vmul.f32 %v351, %v314
      %v368 = vlaneseq
      %v369 = vshrl.u32 %v368, 7
      %v370 = vsub.s32 0, %v369
      %v371 = vrot.slane %v277, %v370
      %v372 = vlaneseq
      %v373 = vshrl.u32 %v372, 7
      %v374 = vsub.s32 0, %v373
      %v375 = vrot.slane %v284, %v374
      %v376 = vlaneseq
      %v377 = vshrl.u32 %v376, 7
      %v378 = vsub.s32 0, %v377
      %v379 = vrot.slane %v285, %v378
      %v380 = vlaneseq
      %v381 = vshrl.u32 %v380, 7
      %v382 = vsub.s32 0, %v381
      %v383 = vrot.slane %v286, %v382
      %v384 = vlaneseq
      %v385 = vshrl.u32 %v384, 7
      %v386 = vsub.s32 0, %v385
      %v387 = vrot.slane %v301, %v386
      %v388 = vlaneseq
      %v389 = vshrl.u32 %v388, 7
      %v390 = vsub.s32 0, %v389
      %v391 = vrot.slane %v308, %v390
      %v392 = vlaneseq
      %v393 = vshrl.u32 %v392, 7
      %v394 = vsub.s32 0, %v393
      %v395 = vrot.slane %v309, %v394
      %v396 = vlaneseq
      %v397 = vshrl.u32 %v396, 7
      %v398 = vsub.s32 0, %v397
      %v399 = vrot.slane %v310, %v398
      %v408 = vmul.f32 %v371, %v316
      %v409 = vmul.f32 %v375, %v317
      %v410 = vmul.f32 %v379, %v318
      %v411 = vmul.f32 %v383, %v319
      %v412 = vmul.f32 %v387, %v316
      %v413 = vmul.f32 %v391, %v317
      %v414 = vmul.f32 %v395, %v318
      %v415 = vmul.f32 %v399, %v319
      %v416 = vsub.f32 %v360, %v408
      %v417 = vsub.f32 %v361, %v409
      %v418 = vsub.f32 %v362, %v410
      %v419 = vsub.f32 %v363, %v411
      %v420 = vsub.f32 %v364, %v412
      %v421 = vsub.f32 %v365, %v413
      %v422 = vsub.f32 %v366, %v414
      %v423 = vsub.f32 %v367, %v415
      %vm424 = vcmask 1043456
      %v425 = vsel %vm424, %v416, 0.0
      %v426 = vsel %vm424, %v417, 0.0
      %v427 = vadd.f32 %v425, %v426
      %v428 = vsel %vm424, %v418, 0.0
      %v429 = vadd.f32 %v427, %v428
      %v430 = vsel %vm424, %v419, 0.0
      %v431 = vadd.f32 %v429, %v430
      %v432 = vsel %vm424, %v420, 0.0
      %v433 = vsel %vm424, %v421, 0.0
      %v434 = vadd.f32 %v432, %v433
      %v435 = vsel %vm424, %v422, 0.0
      %v436 = vadd.f32 %v434, %v435
      %v437 = vsel %vm424, %v423, 0.0
      %v438 = vadd.f32 %v436, %v437
      %439 = vst [vmem:[%s205] sm:$0xf] %v431
      %440 = vst [vmem:[%s205 + $0x4] sm:$0xf] %v438
      %v441 = vmul.f32 %v323, %v316
      %v442 = vmul.f32 %v327, %v317
      %v443 = vmul.f32 %v331, %v318
      %v444 = vmul.f32 %v335, %v319
      %v445 = vmul.f32 %v339, %v316
      %v446 = vmul.f32 %v343, %v317
      %v447 = vmul.f32 %v347, %v318
      %v448 = vmul.f32 %v351, %v319
      %v449 = vmul.f32 %v371, %v311
      %v450 = vmul.f32 %v375, %v312
      %v451 = vmul.f32 %v379, %v313
      %v452 = vmul.f32 %v383, %v314
      %v453 = vmul.f32 %v387, %v311
      %v454 = vmul.f32 %v391, %v312
      %v455 = vmul.f32 %v395, %v313
      %v456 = vmul.f32 %v399, %v314
      %v457 = vadd.f32 %v441, %v449
      %v458 = vadd.f32 %v442, %v450
      %v459 = vadd.f32 %v443, %v451
      %v460 = vadd.f32 %v444, %v452
      %v461 = vadd.f32 %v445, %v453
      %v462 = vadd.f32 %v446, %v454
      %v463 = vadd.f32 %v447, %v455
      %v464 = vadd.f32 %v448, %v456
      %v465 = vsel %vm424, %v457, 0.0
      %v466 = vsel %vm424, %v458, 0.0
      %v467 = vadd.f32 %v465, %v466
      %v468 = vsel %vm424, %v459, 0.0
      %v469 = vadd.f32 %v467, %v468
      %v470 = vsel %vm424, %v460, 0.0
      %v471 = vadd.f32 %v469, %v470
      %v472 = vsel %vm424, %v461, 0.0
      %v473 = vsel %vm424, %v462, 0.0
      %v474 = vadd.f32 %v472, %v473
      %v475 = vsel %vm424, %v463, 0.0
      %v476 = vadd.f32 %v474, %v475
      %v477 = vsel %vm424, %v464, 0.0
      %v478 = vadd.f32 %v476, %v477
      %s479 = scalar_lea.vmem %s205, 8
      %480 = vst [vmem:[%s479] sm:$0xf] %v471
      %481 = vst [vmem:[%s479 + $0x4] sm:$0xf] %v478
      %p482 = scmp.lt.s32.totalorder %s17, 1
      %s483 = scalar_select %p482, %s17, 1
      %p484 = scmp.lt.s32.totalorder %s18, 0
      %s485 = scalar_select %p484, %s18, 0
      %s486 = smul.addr %s483, 4
      %s487 = sadd.s32 %s485, %s486
      %s488 = smul.addr %s487, 4
      %s489 = scalar_lea.vmem %s2, %s488
      // Predicated region
      $region29: #{spectral_conv2d_fast.1} parent=27 // pred_check
        %p490 = pneg %p101
      $region30: #{spectral_conv2d_fast.1} parent=27 // pred_check_branch
        %492 = sbr.rel (%p490) target = $region32
      $region31: #{spectral_conv2d_fast.1} parent=27 // pred_region
        _
      $region32: #{spectral_conv2d_fast.1} parent=27 // pred_fallthru
        _
    $region28: #{spectral_conv2d_fast.1} parent=5 // pred_fallthru
      _
    %p493 = scmp.le.s32.totalorder 2, %s8
    // Predicated region
    $region33: #{spectral_conv2d_fast.1} parent=5 // pred_check
      %p494 = pneg %p493
    $region34: #{spectral_conv2d_fast.1} parent=5 // pred_check_branch
      %496 = sbr.rel (%p494) target = $region36
    $region35: #{spectral_conv2d_fast.1} parent=5 // pred_region
      %s497 = ssub.s32 %s8, 2
      // Predicated region
      $region37: #{spectral_conv2d_fast.1} parent=35 // pred_check
        %p498 = pneg %p107
      $region38: #{spectral_conv2d_fast.1} parent=35 // pred_check_branch
        %500 = sbr.rel (%p498) target = $region40
      $region39: #{spectral_conv2d_fast.1} parent=35 // pred_region
        %p501 = scmp.lt.s32.totalorder %s19, 1
        %s502 = scalar_select %p501, %s19, 1
        %p503 = scmp.lt.s32.totalorder %s20, 0
        %s504 = scalar_select %p503, %s20, 0
        %s505 = smul.addr %s502, 4
        %s506 = sadd.s32 %s504, %s505
        %s507 = smul.addr %s506, 4
        %s508 = scalar_lea.vmem %s2, %s507
      $region40: #{spectral_conv2d_fast.1} parent=35 // pred_fallthru
        _
    $region36: #{spectral_conv2d_fast.1} parent=5 // pred_fallthru
      _
  $region6: #{spectral_conv2d_fast.1} parent=0 // loop_footer
    %s12 = sadd.s32 1, %s8
  $region7: #{spectral_conv2d_fast.1} parent=0 // loop_footer_branch
    %7 = sbr.rel target = $region3
  $region8: #{spectral_conv2d_fast.1} parent=0 // loop_exit
    _

// kernel: reverse.0
$region0: #{reverse.0}
  %s0 = inlined_call_operand.vmem [shape: f32[2,4,16,7], index: 0, kind: input, shape index: {}]
  %s1 = inlined_call_operand.vmem [shape: f32[2,4,16,7], index: 1, kind: output, shape index: {}]
  $region1: #{reverse.0} parent=0
    #allocation0 [shape = 'u8[65536]{0}', space=vmem, size = 0x10000, scoped, tag = 'operand span for operand 0']
    #allocation1 [shape = 'u8[32768]{0}', space=vmem, size = 0x8000, scoped, tag = 'operand span for operand 1']
    %s2 = scalar_lea.vmem [#allocation0], 8
    // Predicated region
    $region2: #{reverse.0} parent=1 // pred_check
      _
    $region3: #{reverse.0} parent=1 // pred_check_branch
      %4 = sbr.rel (0) target = $region5
    $region4: #{reverse.0} parent=1 // pred_region
      // Predicated region
      $region6: #{reverse.0} parent=4 // pred_check
        _
      $region7: #{reverse.0} parent=4 // pred_check_branch
        %6 = sbr.rel (0) target = $region9
      $region8: #{reverse.0} parent=4 // pred_region
        // Predicated region
        $region21: #{reverse.0} parent=8 // pred_check
          _
        $region22: #{reverse.0} parent=8 // pred_check_branch
          %35 = sbr.rel (0) target = $region24
        $region23: #{reverse.0} parent=8 // pred_region
          loop: start=0, step=1, limit=1
          $region25: #{reverse.0} parent=23 // loop_pre_header
            _
          $region26: #{reverse.0} parent=23 // loop_header
            %s37 = sphi 0, %s41
            %p38 = scmp.ge.s32.totalorder %s37, 1
            %s42 = sphi %s0, %s0
            %s43 = sphi %s2, %s2
          $region27: #{reverse.0} parent=23 // loop_header_branch
            %40 = sbr.rel (%p38) target = $region31
          $region28: #{reverse.0} parent=23 // loop_body
            %v44 = vld [vmem:[%s42] sm:$0xff]
            %45 = vst [vmem:[%s43] sm:$0xff] %v44
            %v46 = vld [vmem:[%s42 + $0x8] sm:$0xff]
            %47 = vst [vmem:[%s43 + $0x10] sm:$0xff] %v46
            %v48 = vld [vmem:[%s42 + $0x10] sm:$0xff]
            %49 = vst [vmem:[%s43 + $0x20] sm:$0xff] %v48
            %v50 = vld [vmem:[%s42 + $0x18] sm:$0xff]
            %51 = vst [vmem:[%s43 + $0x30] sm:$0xff] %v50
            %v52 = vld [vmem:[%s42 + $0x20] sm:$0xff]
            %53 = vst [vmem:[%s43 + $0x40] sm:$0xff] %v52
            %v54 = vld [vmem:[%s42 + $0x28] sm:$0xff]
            %55 = vst [vmem:[%s43 + $0x50] sm:$0xff] %v54
            %v56 = vld [vmem:[%s42 + $0x30] sm:$0xff]
            %57 = vst [vmem:[%s43 + $0x60] sm:$0xff] %v56
            %v58 = vld [vmem:[%s42 + $0x38] sm:$0xff]
            %59 = vst [vmem:[%s43 + $0x70] sm:$0xff] %v58
          $region29: #{reverse.0} parent=23 // loop_footer
            %s41 = sadd.s32 1, %s37
          $region30: #{reverse.0} parent=23 // loop_footer_branch
            %36 = sbr.rel target = $region26
          $region31: #{reverse.0} parent=23 // loop_exit
            _
        $region24: #{reverse.0} parent=8 // pred_fallthru
          _
        // Predicated region
        $region32: #{reverse.0} parent=8 // pred_check
          _
        $region33: #{reverse.0} parent=8 // pred_check_branch
          %61 = sbr.rel target = $region35
        $region34: #{reverse.0} parent=8 // pred_region
          _
        $region35: #{reverse.0} parent=8 // pred_fallthru
          _
      $region9: #{reverse.0} parent=4 // pred_fallthru
        _
      // Predicated region
      $region10: #{reverse.0} parent=4 // pred_check
        _
      $region11: #{reverse.0} parent=4 // pred_check_branch
        %8 = sbr.rel target = $region13
      $region12: #{reverse.0} parent=4 // pred_region
        loop: start=0, step=1, limit=1
        $region14: #{reverse.0} parent=12 // loop_pre_header
          _
        $region15: #{reverse.0} parent=12 // loop_header
          %s11 = sphi 0, %s15
          %p12 = scmp.ge.s32.totalorder %s11, 1
          %s16 = sphi %s0, %s0
          %s17 = sphi %s2, %s2
        $region16: #{reverse.0} parent=12 // loop_header_branch
          %14 = sbr.rel (%p12) target = $region20
        $region17: #{reverse.0} parent=12 // loop_body
          %v18 = vld [vmem:[%s16] sm:$0xff]
          %19 = vst [vmem:[%s17] sm:$0xff] %v18
          %v20 = vld [vmem:[%s16 + $0x8] sm:$0xff]
          %21 = vst [vmem:[%s17 + $0x10] sm:$0xff] %v20
          %v22 = vld [vmem:[%s16 + $0x10] sm:$0xff]
          %23 = vst [vmem:[%s17 + $0x20] sm:$0xff] %v22
          %v24 = vld [vmem:[%s16 + $0x18] sm:$0xff]
          %25 = vst [vmem:[%s17 + $0x30] sm:$0xff] %v24
          %v26 = vld [vmem:[%s16 + $0x20] sm:$0xff]
          %27 = vst [vmem:[%s17 + $0x40] sm:$0xff] %v26
          %v28 = vld [vmem:[%s16 + $0x28] sm:$0xff]
          %29 = vst [vmem:[%s17 + $0x50] sm:$0xff] %v28
          %v30 = vld [vmem:[%s16 + $0x30] sm:$0xff]
          %31 = vst [vmem:[%s17 + $0x60] sm:$0xff] %v30
          %v32 = vld [vmem:[%s16 + $0x38] sm:$0xff]
          %33 = vst [vmem:[%s17 + $0x70] sm:$0xff] %v32
        $region18: #{reverse.0} parent=12 // loop_footer
          %s15 = sadd.s32 1, %s11
        $region19: #{reverse.0} parent=12 // loop_footer_branch
          %10 = sbr.rel target = $region15
        $region20: #{reverse.0} parent=12 // loop_exit
          _
      $region13: #{reverse.0} parent=4 // pred_fallthru
        _
    $region5: #{reverse.0} parent=1 // pred_fallthru
      _
    %62 = vnop
    %s63 = scalar_lea.vmem [#allocation0], 7
    %v64 = vld [vmem:[%s63] ss:$-1 sm:$0xff]
    %v65 = vrot.slane %v64, 1
    %66 = vst [vmem:[#allocation1] sm:$0xff] %v65
    %s67 = scalar_lea.vmem [#allocation0], 8
    %s68 = scalar_lea.vmem %s67, 7 [#allocation0]
    %v69 = vld [vmem:[%s68] ss:$-1 sm:$0xff]
    %v70 = vrot.slane %v69, 1
    %v71 = vlaneseq
    %v72 = vshrl.u32 %v71, 7
    %vm73 = vcmp.lt.s32.totalorder %v72, 7
    %74 = vst.msk [vmem:[#allocation1] sm:$0xff] %vm73, %v70
    %s75 = scalar_lea.vmem [#allocation1], 8
    %s76 = scalar_lea.vmem [#allocation0], 16
    %s77 = scalar_lea.vmem %s76, 7 [#allocation0]
    %v78 = vld [vmem:[%s77] ss:$-1 sm:$0xff]
    %v79 = vrot.slane %v78, 1
    %80 = vst [vmem:[%s75] sm:$0xff] %v79
    %s81 = scalar_lea.vmem %s76, 8 [#allocation0]
    %s82 = scalar_lea.vmem %s81, 7 [#allocation0]
    %v83 = vld [vmem:[%s82] ss:$-1 sm:$0xff]
    %v84 = vrot.slane %v83, 1
    %v85 = vlaneseq
    %v86 = vshrl.u32 %v85, 7
    %vm87 = vcmp.lt.s32.totalorder %v86, 7
    %88 = vst.msk [vmem:[%s75] sm:$0xff] %vm87, %v84
    %s89 = scalar_lea.vmem [#allocation1], 16
    %s90 = scalar_lea.vmem [#allocation0], 32
    %s91 = scalar_lea.vmem %s90, 7 [#allocation0]
    %v92 = vld [vmem:[%s91] ss:$-1 sm:$0xff]
    %v93 = vrot.slane %v92, 1
    %94 = vst [vmem:[%s89] sm:$0xff] %v93
    %s95 = scalar_lea.vmem %s90, 8 [#allocation0]
    %s96 = scalar_lea.vmem %s95, 7 [#allocation0]
    %v97 = vld [vmem:[%s96] ss:$-1 sm:$0xff]
    %v98 = vrot.slane %v97, 1
    %v99 = vlaneseq
    %v100 = vshrl.u32 %v99, 7
    %vm101 = vcmp.lt.s32.totalorder %v100, 7
    %102 = vst.msk [vmem:[%s89] sm:$0xff] %vm101, %v98
    %s103 = scalar_lea.vmem [#allocation1], 24
    %s104 = scalar_lea.vmem [#allocation0], 48
    %s105 = scalar_lea.vmem %s104, 7 [#allocation0]
    %v106 = vld [vmem:[%s105] ss:$-1 sm:$0xff]
    %v107 = vrot.slane %v106, 1
    %108 = vst [vmem:[%s103] sm:$0xff] %v107
    %s109 = scalar_lea.vmem %s104, 8 [#allocation0]
    %s110 = scalar_lea.vmem %s109, 7 [#allocation0]
    %v111 = vld [vmem:[%s110] ss:$-1 sm:$0xff]
    %v112 = vrot.slane %v111, 1
    %v113 = vlaneseq
    %v114 = vshrl.u32 %v113, 7
    %vm115 = vcmp.lt.s32.totalorder %v114, 7
    %116 = vst.msk [vmem:[%s103] sm:$0xff] %vm115, %v112
    %s117 = scalar_lea.vmem [#allocation1], 32
    %s118 = scalar_lea.vmem [#allocation0], 64
    %s119 = scalar_lea.vmem %s118, 7 [#allocation0]
    %v120 = vld [vmem:[%s119] ss:$-1 sm:$0xff]
    %v121 = vrot.slane %v120, 1
    %122 = vst [vmem:[%s117] sm:$0xff] %v121
    %s123 = scalar_lea.vmem %s118, 8 [#allocation0]
    %s124 = scalar_lea.vmem %s123, 7 [#allocation0]
    %v125 = vld [vmem:[%s124] ss:$-1 sm:$0xff]
    %v126 = vrot.slane %v125, 1
    %v127 = vlaneseq
    %v128 = vshrl.u32 %v127, 7
    %vm129 = vcmp.lt.s32.totalorder %v128, 7
    %130 = vst.msk [vmem:[%s117] sm:$0xff] %vm129, %v126
    %s131 = scalar_lea.vmem [#allocation1], 40
    %s132 = scalar_lea.vmem [#allocation0], 80
    %s133 = scalar_lea.vmem %s132, 7 [#allocation0]
    %v134 = vld [vmem:[%s133] ss:$-1 sm:$0xff]
    %v135 = vrot.slane %v134, 1
    %136 = vst [vmem:[%s131] sm:$0xff] %v135
    %s137 = scalar_lea.vmem %s132, 8 [#allocation0]
    %s138 = scalar_lea.vmem %s137, 7 [#allocation0]
    %v139 = vld [vmem:[%s138] ss:$-1 sm:$0xff]
    %v140 = vrot.slane %v139, 1
    %v141 = vlaneseq
    %v142 = vshrl.u32 %v141, 7
    %vm143 = vcmp.lt.s32.totalorder %v142, 7
    %144 = vst.msk [vmem:[%s131] sm:$0xff] %vm143, %v140
    %s145 = scalar_lea.vmem [#allocation1], 48
    %s146 = scalar_lea.vmem [#allocation0], 96
    %s147 = scalar_lea.vmem %s146, 7 [#allocation0]
    %v148 = vld [vmem:[%s147] ss:$-1 sm:$0xff]
    %v149 = vrot.slane %v148, 1
    %150 = vst [vmem:[%s145] sm:$0xff] %v149
    %s151 = scalar_lea.vmem %s146, 8 [#allocation0]
    %s152 = scalar_lea.vmem %s151, 7 [#allocation0]
    %v153 = vld [vmem:[%s152] ss:$-1 sm:$0xff]
    %v154 = vrot.slane %v153, 1
    %v155 = vlaneseq
    %v156 = vshrl.u32 %v155, 7
    %vm157 = vcmp.lt.s32.totalorder %v156, 7
    %158 = vst.msk [vmem:[%s145] sm:$0xff] %vm157, %v154
    %s159 = scalar_lea.vmem [#allocation1], 56
    %s160 = scalar_lea.vmem [#allocation0], 112
    %s161 = scalar_lea.vmem %s160, 7 [#allocation0]
    %v162 = vld [vmem:[%s161] ss:$-1 sm:$0xff]
    %v163 = vrot.slane %v162, 1
    %164 = vst [vmem:[%s159] sm:$0xff] %v163
    %s165 = scalar_lea.vmem %s160, 8 [#allocation0]
    %s166 = scalar_lea.vmem %s165, 7 [#allocation0]
    %v167 = vld [vmem:[%s166] ss:$-1 sm:$0xff]
    %v168 = vrot.slane %v167, 1
    %v169 = vlaneseq
    %v170 = vshrl.u32 %v169, 7
    %vm171 = vcmp.lt.s32.totalorder %v170, 7
    %172 = vst.msk [vmem:[%s159] sm:$0xff] %vm171, %v168
    // Predicated region
    $region36: #{reverse.0} parent=1 // pred_check
      _
    $region37: #{reverse.0} parent=1 // pred_check_branch
      %174 = sbr.rel (0) target = $region39
    $region38: #{reverse.0} parent=1 // pred_region
      // Predicated region
      $region40: #{reverse.0} parent=38 // pred_check
        _
      $region41: #{reverse.0} parent=38 // pred_check_branch
        %176 = sbr.rel (0) target = $region43
      $region42: #{reverse.0} parent=38 // pred_region
        // Predicated region
        $region55: #{reverse.0} parent=42 // pred_check
          _
        $region56: #{reverse.0} parent=42 // pred_check_branch
          %205 = sbr.rel (0) target = $region58
        $region57: #{reverse.0} parent=42 // pred_region
          loop: start=0, step=1, limit=1
          $region59: #{reverse.0} parent=57 // loop_pre_header
            _
          $region60: #{reverse.0} parent=57 // loop_header
            %s207 = sphi 0, %s211
            %p208 = scmp.ge.s32.totalorder %s207, 1
            %s212 = sphi [#allocation1], [#allocation1]
            %s213 = sphi %s1, %s1
          $region61: #{reverse.0} parent=57 // loop_header_branch
            %210 = sbr.rel (%p208) target = $region65
          $region62: #{reverse.0} parent=57 // loop_body
            %v214 = vld [vmem:[%s212] sm:$0xff]
            %215 = vst [vmem:[%s213] sm:$0xff] %v214
            %v216 = vld [vmem:[%s212 + $0x8] sm:$0xff]
            %217 = vst [vmem:[%s213 + $0x8] sm:$0xff] %v216
            %v218 = vld [vmem:[%s212 + $0x10] sm:$0xff]
            %219 = vst [vmem:[%s213 + $0x10] sm:$0xff] %v218
            %v220 = vld [vmem:[%s212 + $0x18] sm:$0xff]
            %221 = vst [vmem:[%s213 + $0x18] sm:$0xff] %v220
            %v222 = vld [vmem:[%s212 + $0x20] sm:$0xff]
            %223 = vst [vmem:[%s213 + $0x20] sm:$0xff] %v222
            %v224 = vld [vmem:[%s212 + $0x28] sm:$0xff]
            %225 = vst [vmem:[%s213 + $0x28] sm:$0xff] %v224
            %v226 = vld [vmem:[%s212 + $0x30] sm:$0xff]
            %227 = vst [vmem:[%s213 + $0x30] sm:$0xff] %v226
            %v228 = vld [vmem:[%s212 + $0x38] sm:$0xff]
            %229 = vst [vmem:[%s213 + $0x38] sm:$0xff] %v228
          $region63: #{reverse.0} parent=57 // loop_footer
            %s211 = sadd.s32 1, %s207
          $region64: #{reverse.0} parent=57 // loop_footer_branch
            %206 = sbr.rel target = $region60
          $region65: #{reverse.0} parent=57 // loop_exit
            _
        $region58: #{reverse.0} parent=42 // pred_fallthru
          _
        // Predicated region
        $region66: #{reverse.0} parent=42 // pred_check
          _
        $region67: #{reverse.0} parent=42 // pred_check_branch
          %231 = sbr.rel target = $region69
        $region68: #{reverse.0} parent=42 // pred_region
          _
        $region69: #{reverse.0} parent=42 // pred_fallthru
          _
      $region43: #{reverse.0} parent=38 // pred_fallthru
        _
      // Predicated region
      $region44: #{reverse.0} parent=38 // pred_check
        _
      $region45: #{reverse.0} parent=38 // pred_check_branch
        %178 = sbr.rel target = $region47
      $region46: #{reverse.0} parent=38 // pred_region
        loop: start=0, step=1, limit=1
        $region48: #{reverse.0} parent=46 // loop_pre_header
          _
        $region49: #{reverse.0} parent=46 // loop_header
          %s181 = sphi 0, %s185
          %p182 = scmp.ge.s32.totalorder %s181, 1
          %s186 = sphi [#allocation1], [#allocation1]
          %s187 = sphi %s1, %s1
        $region50: #{reverse.0} parent=46 // loop_header_branch
          %184 = sbr.rel (%p182) target = $region54
        $region51: #{reverse.0} parent=46 // loop_body
          %v188 = vld [vmem:[%s186] sm:$0xff]
          %189 = vst [vmem:[%s187] sm:$0xff] %v188
          %v190 = vld [vmem:[%s186 + $0x8] sm:$0xff]
          %191 = vst [vmem:[%s187 + $0x8] sm:$0xff] %v190
          %v192 = vld [vmem:[%s186 + $0x10] sm:$0xff]
          %193 = vst [vmem:[%s187 + $0x10] sm:$0xff] %v192
          %v194 = vld [vmem:[%s186 + $0x18] sm:$0xff]
          %195 = vst [vmem:[%s187 + $0x18] sm:$0xff] %v194
          %v196 = vld [vmem:[%s186 + $0x20] sm:$0xff]
          %197 = vst [vmem:[%s187 + $0x20] sm:$0xff] %v196
          %v198 = vld [vmem:[%s186 + $0x28] sm:$0xff]
          %199 = vst [vmem:[%s187 + $0x28] sm:$0xff] %v198
          %v200 = vld [vmem:[%s186 + $0x30] sm:$0xff]
          %201 = vst [vmem:[%s187 + $0x30] sm:$0xff] %v200
          %v202 = vld [vmem:[%s186 + $0x38] sm:$0xff]
          %203 = vst [vmem:[%s187 + $0x38] sm:$0xff] %v202
        $region52: #{reverse.0} parent=46 // loop_footer
          %s185 = sadd.s32 1, %s181
        $region53: #{reverse.0} parent=46 // loop_footer_branch
          %180 = sbr.rel target = $region49
        $region54: #{reverse.0} parent=46 // loop_exit
          _
      $region47: #{reverse.0} parent=38 // pred_fallthru
        _
    $region39: #{reverse.0} parent=1 // pred_fallthru
      _
    %232 = vnop

</llo_original>
